<compile_context>
chip_gen: v7x
topology: tpu7x:2x2x1
jax: 0.10.0
libtpu: 0.0.40
codegen_flags: <defaults>
</compile_context>

<pallas_src>
import math
import functools

import jax
import jax.numpy as jnp
from jax.experimental import pallas as pl
from jax.experimental.pallas import tpu as pltpu


_NEG_EDGE = -9.0e15   # torch's zero_vec constant for non-edges
_NEG_PAD = -1.0e30    # strictly smaller: padded columns never receive weight


def _round_up(x, m):
    return ((x + m - 1) // m) * m


def _vmem_capacity_bytes():
    """Physical VMEM per TensorCore; conservative fallback = v7x (64 MiB)."""
    try:
        info = pltpu.get_tpu_info()
        cap = getattr(info, "vmem_capacity_bytes", None)
        if cap:
            return int(cap)
    except Exception:
        pass
    return 64 * 1024 * 1024


# ---------------- pass 1: projection + fused attention mat-vec ----------------

def _proj_kernel(x_ref, w_ref, a_ref, h_ref, f_ref):
    # h = [x | 1] @ [W | e_ones] in f32 (ones column lands at index Fout).
    h = jnp.dot(x_ref[...], w_ref[...], preferred_element_type=jnp.float32)   # (Tq, Fp)
    # Fused attention mat-vecs, lane-dense store: f[:,0] = h@a1, f[:,1] = h@a2.
    f_ref[...] = jnp.dot(h, a_ref[...], preferred_element_type=jnp.float32)   # (Tq, 128)
    h_ref[...] = h.astype(h_ref.dtype)                                        # bf16


# ---------------- pass 2: flash-style masked softmax + attention @ h ----------

def _attn_kernel(f1_ref, f2t_ref, neg_ref, adj_ref, h_ref, o_ref, m_sc,
                 *, alpha, concat, ones_col, tk, h_resident):
    ki = pl.program_id(1)

    @pl.when(ki == 0)
    def _init():
        m_sc[...] = jnp.full(m_sc.shape, -jnp.inf, jnp.float32)
        o_ref[...] = jnp.zeros(o_ref.shape, o_ref.dtype)

    # Pairwise logits for this (Tq, Tk) tile: e[i, j] = f1[i] + f2[j].
    e = f1_ref[...] + f2t_ref[...]                  # (Tq, Tk) f32 broadcast add
    e = jnp.maximum(e, alpha * e)                   # LeakyReLU (0 < alpha < 1)
    # Non-edges -> -9e15 (torch constant), padded columns -> -1e30, both coming
    # from a precomputed per-column row (no iota / widening in the hot loop).
    e = jnp.where(adj_ref[...] != 0, e, neg_ref[...])

    # Online softmax update; the accumulator is o_ref itself (resident over ki).
    m_prev = m_sc[...]
    m_new = jnp.maximum(m_prev, jnp.max(e, axis=1, keepdims=True))
    corr = jnp.exp(m_prev - m_new)
    p = jnp.exp(e - m_new)
    if h_resident:
        hk = h_ref[pl.ds(pl.multiple_of(ki * tk, tk), tk), :]
    else:
        hk = h_ref[...]
    # p @ h also accumulates the softmax denominator in column `ones_col`
    # (h[:, ones_col] == 1), so no per-step cross-lane sum is needed.
    o_ref[...] = corr * o_ref[...] + jnp.dot(
        p.astype(hk.dtype), hk, preferred_element_type=jnp.float32)
    m_sc[...] = m_new

    @pl.when(ki == pl.num_programs(1) - 1)
    def _finalize():
        acc = o_ref[...]
        denom = acc[:, ones_col:ones_col + 1]
        out = acc * pl.reciprocal(denom, approx=True)
        if concat:
            out = jnp.where(out > 0, out, jnp.exp(out) - 1.0)   # ELU
        o_ref[...] = out.astype(o_ref.dtype)


def graph_attention_layer(x, adj, W, a, *, alpha=0.2, concat=True, dropout=0.0):
    """Forward pass of the PyTorch GraphAttentionLayer (eval mode)."""
    # TODO(synk): F.dropout(attention, dropout, training=True) is stochastic;
    # eval-mode (identity) semantics are implemented here.
    N, Fin = x.shape
    Fout = W.shape[1]
    # Lane-dense padded feature dim with one spare column (index Fout) carrying
    # a constant 1.0 so p @ h also produces the softmax denominator on the MXU.
    Fp = _round_up(Fout + 1, 128)
    ones_col = Fout

    # ---- tile selection (Tq divides Tk so one N_pad serves both; keep n_q >= 2
    # so megacore parts can shard the row-tile axis across both TensorCores) ----
    n128 = _round_up(N, 128)
    if n128 >= 8192:
        Tq, Tk = 1024, 1024
    elif n128 >= 1024:
        Tq, Tk = 512, 1024
    elif n128 >= 512:
        Tq, Tk = 256, 512
    elif n128 >= 256:
        Tq, Tk = 128, 256
    else:
        Tq, Tk = 128, 128
    N_pad = _round_up(N, Tk)
    n_q = N_pad // Tq
    n_k = N_pad // Tk

    f32 = jnp.float32

    # ---- host-side packing ----------------------------------------------------
    # [x | 1] so h = x_aug @ W_aug has a constant 1.0 in column `ones_col`.
    x_p = jnp.zeros((N_pad, Fin + 1), f32)
    x_p = x_p.at[:N, :Fin].set(x.astype(f32))
    x_p = x_p.at[:, Fin].set(1.0)
    W_p = jnp.zeros((Fin + 1, Fp), f32)
    W_p = W_p.at[:Fin, :Fout].set(W.astype(f32))
    W_p = W_p.at[Fin, ones_col].set(1.0)
    a_mat = jnp.zeros((Fp, 128), f32)              # lane-dense attention vectors
    a_mat = a_mat.at[:Fout, 0].set(a[:Fout, 0].astype(f32))
    a_mat = a_mat.at[:Fout, 1].set(a[Fout:, 0].astype(f32))

    # Adjacency as int8 (4x less HBM traffic than f32 - the dominant N^2 stream).
    # NOTE: callers with large graphs should pass a pre-thresholded int8
    # adjacency (ideally already padded) to avoid this O(N^2) repack.
    adj_i8 = adj if adj.dtype == jnp.int8 else (adj > 0).astype(jnp.int8)
    if adj_i8.shape != (N_pad, N_pad):
        adj_i8 = jnp.zeros((N_pad, N_pad), jnp.int8).at[:N, :N].set(adj_i8[:N, :N])

    # Precomputed masked-fill row: -9e15 for real columns, -1e30 for padding.
    col = jnp.arange(N_pad, dtype=jnp.int32)
    neg_row = jnp.where(col < N, jnp.float32(_NEG_EDGE),
                        jnp.float32(_NEG_PAD)).reshape(1, N_pad)

    # ---- pass 1: projection + fused attention mat-vec --------------------------
    h_bf16, f128 = pl.pallas_call(
        _proj_kernel,
        out_shape=(
            jax.ShapeDtypeStruct((N_pad, Fp), jnp.bfloat16),
            jax.ShapeDtypeStruct((N_pad, 128), f32),
        ),
        grid_spec=pltpu.PrefetchScalarGridSpec(
            num_scalar_prefetch=0,
            grid=(n_q,),
            in_specs=[
                pl.BlockSpec((Tq, Fin + 1), lambda i: (i, 0)),
                pl.BlockSpec((Fin + 1, Fp), lambda i: (0, 0)),
                pl.BlockSpec((Fp, 128), lambda i: (0, 0)),
            ],
            out_specs=(
                pl.BlockSpec((Tq, Fp), lambda i: (i, 0)),
                pl.BlockSpec((Tq, 128), lambda i: (i, 0)),
            ),
        ),
        compiler_params=pltpu.CompilerParams(
            dimension_semantics=("parallel",)),
    )(x_p, W_p, a_mat)

    f1 = f128[:, 0:1]                      # (N_pad, 1) column for the q side
    f2t = jnp.transpose(f128[:, 1:2])      # (1, N_pad) row for the k side

    # ---- VMEM budget: keep h resident (fetched once) when it fits ---------------
    vmem_cap = _vmem_capacity_bytes()
    vmem_limit = int(vmem_cap * 0.75)
    budget = int(vmem_cap * 0.6)

    h_bytes = N_pad * Fp * 2                        # bf16
    fixed = 2 * Tq * Tk                             # adj tiles (int8, dbl-buffered)
    fixed += 2 * Tq * Fp * 4                        # resident output accumulator
    fixed += 2 * (Tq * 4 + 2 * Tk * 4) + Tq * 4     # f1 / f2t / neg tiles + m scratch
    fixed += 2 * 1024 * 1024                        # compiler scratch headroom
    h_resident = (2 * h_bytes + fixed) <= budget    # x2: default double buffering

    if h_resident:
        h_spec = pl.BlockSpec((N_pad, Fp), lambda qi, ki: (0, 0))
    else:
        h_spec = pl.BlockSpec((Tk, Fp), lambda qi, ki: (ki, 0))

    # ---- pass 2: flash-style masked softmax + attention @ h --------------------
    attn = functools.partial(
        _attn_kernel, alpha=float(alpha), concat=bool(concat),
        ones_col=ones_col, tk=Tk, h_resident=h_resident)
    out_pad = pl.pallas_call(
        attn,
        out_shape=jax.ShapeDtypeStruct((N_pad, Fp), f32),
        grid_spec=pltpu.PrefetchScalarGridSpec(
            num_scalar_prefetch=0,
            grid=(n_q, n_k),
            in_specs=[
                pl.BlockSpec((Tq, 1), lambda qi, ki: (qi, 0)),
                pl.BlockSpec((1, Tk), lambda qi, ki: (0, ki)),
                pl.BlockSpec((1, Tk), lambda qi, ki: (0, ki)),
                pl.BlockSpec((Tq, Tk), lambda qi, ki: (qi, ki)),
                h_spec,
            ],
            out_specs=pl.BlockSpec((Tq, Fp), lambda qi, ki: (qi, 0)),
            scratch_shapes=[
                pltpu.VMEM((Tq, 1), f32),    # running max m
            ],
        ),
        compiler_params=pltpu.CompilerParams(
            dimension_semantics=("parallel", "arbitrary"),
            vmem_limit_bytes=vmem_limit),
    )(f1, f2t, neg_row, adj_i8, h_bf16)

    return out_pad[:N, :Fout]


def xavier_uniform(key, shape, gain):
    fan_in, fan_out = shape[1], shape[0]  # torch convention for 2-D tensors
    bound = gain * math.sqrt(6.0 / (fan_in + fan_out))
    return jax.random.uniform(key, shape, jnp.float32, -bound, bound)


def reference_forward(x, adj, W, a, alpha, concat):
    # pure-JAX reference mirroring the PyTorch forward (eval mode)
    h = x @ W
    N = h.shape[0]
    Fout = W.shape[1]
    a_input = jnp.concatenate(
        [jnp.repeat(h, N, axis=0), jnp.tile(h, (N, 1))], axis=1
    ).reshape(N, N, 2 * Fout)
    e = jnp.squeeze(a_input @ a, axis=2)
    e = jnp.where(e > 0, e, alpha * e)
    e = jnp.where(adj > 0, e, jnp.full_like(e, -9.0e15))
    attention = jax.nn.softmax(e, axis=1)
    h_prime = attention @ h
    if concat:
        h_prime = jnp.where(h_prime > 0, h_prime, jnp.exp(h_prime) - 1.0)
    return h_prime


if __name__ == "__main__":
    # small shapes consistent with the module
    N = 8            # number of graph nodes
    in_features = 16
    out_features = 32
    dropout = 0.6    # unused at inference (identity)
    alpha = 0.2
    concat = True

    key = jax.random.PRNGKey(0)
    kx, kadj, kW, ka = jax.random.split(key, 4)

    x = jax.random.normal(kx, (N, in_features), jnp.float32)
    # random adjacency with self-loops
    adj = (jax.random.uniform(kadj, (N, N)) > 0.5).astype(jnp.float32)
    adj = jnp.maximum(adj, jnp.eye(N, dtype=jnp.float32))

    # deterministic parameter init (xavier_uniform_, gain=1.414)
    W = xavier_uniform(kW, (in_features, out_features), gain=1.414)
    a = xavier_uniform(ka, (2 * out_features, 1), gain=1.414)

    out = graph_attention_layer(x, adj, W, a, alpha=alpha, concat=concat,
                                dropout=dropout)
    out = jax.block_until_ready(out)

    ref = reference_forward(x, adj, W, a, alpha, concat)
    assert out.shape == (N, out_features)
    # attention @ h uses bf16 MXU inputs with f32 accumulation -> ~1e-3 abs error
    assert jnp.allclose(out, ref, atol=2e-2, rtol=2e-2), "mismatch vs reference"

    print("KERNEL_OK")
</pallas_src>

<mosaic_0001>
module attributes {stable_mosaic.version = 11 : i64} {
  func.func @_proj_kernel(%arg0: i32, %arg1: memref<128x17xf32, #tpu.memory_space<vmem>>, %arg2: memref<17x128xf32, #tpu.memory_space<vmem>>, %arg3: memref<128x128xf32, #tpu.memory_space<vmem>>, %arg4: memref<128x128xbf16, #tpu.memory_space<vmem>>, %arg5: memref<128x128xf32, #tpu.memory_space<vmem>>) attributes {dimension_semantics = [#tpu.dimension_semantics<parallel>], iteration_bounds = array<i64: 1>, scalar_prefetch = 0 : i64, scratch_operands = 0 : i64, tpu.core_type = #tpu.core_type<tc>, window_params = [{transform_indices = @transform_0, window_bounds = array<i64: 128, 17>}, {pipeline_mode = #tpu.pipeline_mode<synchronous>, transform_indices = @transform_1, window_bounds = array<i64: 17, 128>}, {pipeline_mode = #tpu.pipeline_mode<synchronous>, transform_indices = @transform_2, window_bounds = array<i64: 128, 128>}, {transform_indices = @transform_3, window_bounds = array<i64: 128, 128>}, {transform_indices = @transform_4, window_bounds = array<i64: 128, 128>}]} {
    %c0 = arith.constant 0 : index
    %c0_0 = arith.constant 0 : index
    %0 = vector.load %arg1[%c0, %c0_0] : memref<128x17xf32, #tpu.memory_space<vmem>>, vector<128x17xf32>
    %c0_1 = arith.constant 0 : index
    %c0_2 = arith.constant 0 : index
    %1 = vector.load %arg2[%c0_1, %c0_2] : memref<17x128xf32, #tpu.memory_space<vmem>>, vector<17x128xf32>
    %cst = arith.constant dense<0.000000e+00> : vector<128x128xf32>
    %2 = tpu.matmul %0, %1, %cst {dimension_numbers = #tpu.dot_dimension_numbers<[1], [0], [0], [1], [0, 0, 1, 1], [], []>} : vector<128x17xf32>, vector<17x128xf32>, vector<128x128xf32> -> vector<128x128xf32>
    %c0_3 = arith.constant 0 : index
    %c0_4 = arith.constant 0 : index
    %3 = vector.load %arg3[%c0_3, %c0_4] : memref<128x128xf32, #tpu.memory_space<vmem>>, vector<128x128xf32>
    %cst_5 = arith.constant dense<0.000000e+00> : vector<128x128xf32>
    %4 = tpu.matmul %2, %3, %cst_5 {dimension_numbers = #tpu.dot_dimension_numbers<[1], [0], [0], [1], [0, 0, 1, 1], [], []>} : vector<128x128xf32>, vector<128x128xf32>, vector<128x128xf32> -> vector<128x128xf32>
    %c0_6 = arith.constant 0 : index
    %c0_7 = arith.constant 0 : index
    %5 = vector.load %arg5[%c0_6, %c0_7] : memref<128x128xf32, #tpu.memory_space<vmem>>, vector<128x128xf32>
    tpu.vector_store %arg5[%c0_6, %c0_7], %4 {strides = array<i32>} : memref<128x128xf32, #tpu.memory_space<vmem>>, vector<128x128xf32>,
    %6 = arith.truncf %2 : vector<128x128xf32> to vector<128x128xbf16>
    %c0_8 = arith.constant 0 : index
    %c0_9 = arith.constant 0 : index
    %7 = vector.load %arg4[%c0_8, %c0_9] : memref<128x128xbf16, #tpu.memory_space<vmem>>, vector<128x128xbf16>
    tpu.vector_store %arg4[%c0_8, %c0_9], %6 {strides = array<i32>} : memref<128x128xbf16, #tpu.memory_space<vmem>>, vector<128x128xbf16>,
    return
  }
  func.func @transform_0(%arg0: i32) -> (i32, i32) {
    %c0_i32 = arith.constant 0 : i32
    %c0_i32_0 = arith.constant 0 : i32
    return %arg0, %c0_i32 : i32, i32
  }
  func.func @transform_1(%arg0: i32) -> (i32, i32) {
    %c0_i32 = arith.constant 0 : i32
    %c0_i32_0 = arith.constant 0 : i32
    %c0_i32_1 = arith.constant 0 : i32
    return %c0_i32, %c0_i32_0 : i32, i32
  }
  func.func @transform_2(%arg0: i32) -> (i32, i32) {
    %c0_i32 = arith.constant 0 : i32
    %c0_i32_0 = arith.constant 0 : i32
    %c0_i32_1 = arith.constant 0 : i32
    return %c0_i32, %c0_i32_0 : i32, i32
  }
  func.func @transform_3(%arg0: i32) -> (i32, i32) {
    %c0_i32 = arith.constant 0 : i32
    %c0_i32_0 = arith.constant 0 : i32
    return %arg0, %c0_i32 : i32, i32
  }
  func.func @transform_4(%arg0: i32) -> (i32, i32) {
    %c0_i32 = arith.constant 0 : i32
    %c0_i32_0 = arith.constant 0 : i32
    return %arg0, %c0_i32 : i32, i32
  }
}

</mosaic_0001>

<llo_original>
// kernel: tpu_custom_call.1
$region0: #{tpu_custom_call.1}
  #allocation0 [shape = 'u32[]', space=smem, size = 0x4, offset = 0x4, fixed_abs, tag = 'smem constant byte address 0x4 - core index']
  #allocation1 [shape = 'u32[144,128]{1,0:T(1,128)}', space=vmem, size = 0x12000, scoped, tag = 'internal scratch']
  %s0 = inlined_call_operand.vmem [shape: f32[128,17], index: 0, kind: input, shape index: {}]
  %s1 = inlined_call_operand.vmem [shape: f32[17,128], index: 1, kind: input, shape index: {}]
  %s2 = inlined_call_operand.vmem [shape: f32[128,128], index: 2, kind: input, shape index: {}]
  %s3 = inlined_call_operand.hbm [shape: bf16[128,128], index: 3, kind: output, shape index: {0}]
  %s4 = inlined_call_operand.hbm [shape: f32[128,128], index: 4, kind: output, shape index: {1}]
  %5 = xla_tuple %s3, %s4
  %s6 = sld [smem:[#allocation0]]
  $region30: #{tpu_custom_call.1} parent=0
    _
  %s8 = ssub.s32 1, %s6
  %s9 = scalar_select 0, %s8, %s6
  $region1: #{tpu_custom_call.1} parent=0
    #allocation2 [shape = 'u8[32768]{0}', space=vmem, size = 0x8000, scoped, tag = 'output window, operand 0, single buffered']
    #allocation3 [shape = 's32[1]{0}', space=sflag, size = 0x4, scoped, tag = 'scoped memory for tpu_custom_call.1']
    #allocation4 [shape = 'u8[65536]{0}', space=vmem, size = 0x10000, scoped, tag = 'output window, operand 1, single buffered']
    #allocation5 [shape = 's32[1]{0}', space=sflag, size = 0x4, scoped, tag = 'scoped memory for tpu_custom_call.1']
    %10 = vsyncpa [#allocation3], 0
    %11 = vsyncpa [#allocation5], 0
    // Predicated region
    $region2: #{tpu_custom_call.1} parent=1 // pred_check
      _
    $region3: #{tpu_custom_call.1} parent=1 // pred_check_branch
      %13 = sbr.rel (0) target = $region5
    $region4: #{tpu_custom_call.1} parent=1 // pred_region
      _
    $region5: #{tpu_custom_call.1} parent=1 // pred_fallthru
      _
    // Predicated region
    $region6: #{tpu_custom_call.1} parent=1 // pred_check
      _
    $region7: #{tpu_custom_call.1} parent=1 // pred_check_branch
      %15 = sbr.rel (0) target = $region9
    $region8: #{tpu_custom_call.1} parent=1 // pred_region
      _
    $region9: #{tpu_custom_call.1} parent=1 // pred_fallthru
      _
    // Predicated region
    $region10: #{tpu_custom_call.1} parent=1 // pred_check
      _
    $region11: #{tpu_custom_call.1} parent=1 // pred_check_branch
      %17 = sbr.rel (0) target = $region13
    $region12: #{tpu_custom_call.1} parent=1 // pred_region
      _
    $region13: #{tpu_custom_call.1} parent=1 // pred_fallthru
      _
    %v18 = vld [vmem:[%s0] sm:$0xff]
    %v19 = vld [vmem:[%s0 + $0x8] sm:$0xff]
    %v20 = vld [vmem:[%s0 + $0x10] sm:$0xff]
    %v21 = vld [vmem:[%s0 + $0x18] sm:$0xff]
    %v22 = vld [vmem:[%s0 + $0x20] sm:$0xff]
    %v23 = vld [vmem:[%s0 + $0x28] sm:$0xff]
    %v24 = vld [vmem:[%s0 + $0x30] sm:$0xff]
    %v25 = vld [vmem:[%s0 + $0x38] sm:$0xff]
    %v26 = vld [vmem:[%s0 + $0x40] sm:$0xff]
    %v27 = vld [vmem:[%s0 + $0x48] sm:$0xff]
    %v28 = vld [vmem:[%s0 + $0x50] sm:$0xff]
    %v29 = vld [vmem:[%s0 + $0x58] sm:$0xff]
    %v30 = vld [vmem:[%s0 + $0x60] sm:$0xff]
    %v31 = vld [vmem:[%s0 + $0x68] sm:$0xff]
    %v32 = vld [vmem:[%s0 + $0x70] sm:$0xff]
    %v33 = vld [vmem:[%s0 + $0x78] sm:$0xff]
    %v34 = vld [vmem:[%s1] sm:$0xff]
    %v35 = vld [vmem:[%s1 + $0x8] sm:$0xff]
    %v36 = vld [vmem:[%s1 + $0x10] sm:$0x1]
    %vm37 = vcmask 138240
    %v39 = vsel %vm37, %v18, 0
    %v42 = vsel %vm37, %v19, 0
    %v45 = vsel %vm37, %v20, 0
    %v48 = vsel %vm37, %v21, 0
    %v51 = vsel %vm37, %v22, 0
    %v54 = vsel %vm37, %v23, 0
    %v57 = vsel %vm37, %v24, 0
    %v60 = vsel %vm37, %v25, 0
    %v63 = vsel %vm37, %v26, 0
    %v66 = vsel %vm37, %v27, 0
    %v69 = vsel %vm37, %v28, 0
    %v72 = vsel %vm37, %v29, 0
    %v75 = vsel %vm37, %v30, 0
    %v78 = vsel %vm37, %v31, 0
    %v81 = vsel %vm37, %v32, 0
    %v84 = vsel %vm37, %v33, 0
    %vm86 = vcmask 1040384
    %v88 = vsel %vm86, %v36, 0
    %90 = vmatprep.subr.mxu0 0.0
    %91 = vmatpush1.msra.mxu0 %v34
    %92 = vmatprep.subr.mxu0 0.0
    %93 = vmatpush1.msra.mxu0 %v35
    %94 = vmatprep.subr.mxu0 0.0
    %95 = vmatpush1.msra.mxu0 %v88
    %96 = vmatprep.subr.mxu0 0.0
    %97 = vmatpush1.msra.mxu0 0.0
    %98 = vmatprep.subr.mxu0 0.0
    %99 = vmatpush1.msra.mxu0 0.0
    %100 = vmatprep.subr.mxu0 0.0
    %101 = vmatpush1.msra.mxu0 0.0
    %102 = vmatprep.subr.mxu0 0.0
    %103 = vmatpush1.msra.mxu0 0.0
    %104 = vmatprep.subr.mxu0 0.0
    %105 = vmatpush1.msra.mxu0 0.0
    %106 = vmatprep.subr.mxu0 0.0
    %107 = vmatpush1.msra.mxu0 0.0
    %108 = vmatprep.subr.mxu0 0.0
    %109 = vmatpush1.msra.mxu0 0.0
    %110 = vmatprep.subr.mxu0 0.0
    %111 = vmatpush1.msra.mxu0 0.0
    %112 = vmatprep.subr.mxu0 0.0
    %113 = vmatpush1.msra.mxu0 0.0
    %114 = vmatprep.subr.mxu0 0.0
    %115 = vmatpush1.msra.mxu0 0.0
    %116 = vmatprep.subr.mxu0 0.0
    %117 = vmatpush1.msra.mxu0 0.0
    %118 = vmatprep.subr.mxu0 0.0
    %119 = vmatpush1.msra.mxu0 0.0
    %120 = vmatprep.subr.mxu0 0.0
    %121 = vmatpush1.msra.mxu0 0.0
    %122 = vmatprep.subr.mxu0 0.0
    %123 = vmatpush1.msra.mxu0 0.0
    %124 = vmatprep.subr.mxu0 0.0
    %125 = vmatpush1.msra.mxu0 0.0
    %126 = vmatprep.subr.mxu0 0.0
    %127 = vmatpush1.msra.mxu0 0.0
    %128 = vmatprep.subr.mxu0 0.0
    %129 = vmatpush1.msra.mxu0 0.0
    %130 = vmatprep.subr.mxu0 0.0
    %131 = vmatpush1.msra.mxu0 0.0
    %132 = vmatprep.subr.mxu0 0.0
    %133 = vmatpush1.msra.mxu0 0.0
    %134 = vmatprep.subr.mxu0 0.0
    %135 = vmatpush1.msra.mxu0 0.0
    %136 = vmatprep.subr.mxu0 0.0
    %137 = vmatpush1.msra.mxu0 0.0
    %138 = vmatprep.subr.mxu0 0.0
    %139 = vmatpush1.msra.mxu0 0.0
    %140 = vmatprep.subr.mxu0 0.0
    %141 = vmatpush1.msra.mxu0 0.0
    %142 = vmatprep.subr.mxu0 0.0
    %143 = vmatpush1.msra.mxu0 0.0
    %144 = vmatprep.subr.mxu0 0.0
    %145 = vmatpush1.msra.mxu0 0.0
    %146 = vmatprep.subr.mxu0 0.0
    %147 = vmatpush1.msra.mxu0 0.0
    %148 = vmatprep.subr.mxu0 0.0
    %149 = vmatpush1.msra.mxu0 0.0
    %150 = vmatprep.subr.mxu0 0.0
    %151 = vmatpush1.msra.mxu0 0.0
    %152 = vmatprep.subr.mxu0 0.0
    %153 = vmatpush1.msra.mxu0 0.0
    %154 = vmatprep.mubr.f32.mxu0 0.0
    %155 = vmatmul.mubr.f32.gmra.mrb[0].mxu0 %v39
    %v156 = vpop.f32.mrb[0].mxu0
    %v157 = vadd.f32 0.0, %v156
    %v158 = vpop.f32.mrb[0].mxu0
    %159 = vmatprep.mubr.f32.mxu0 0.0
    %160 = vmatmul.mubr.f32.gmra.mrb[0].mxu0 %v42
    %v161 = vpop.f32.mrb[0].mxu0
    %v162 = vadd.f32 0.0, %v161
    %v163 = vpop.f32.mrb[0].mxu0
    %164 = vmatprep.mubr.f32.mxu0 0.0
    %165 = vmatmul.mubr.f32.gmra.mrb[0].mxu0 %v45
    %v166 = vpop.f32.mrb[0].mxu0
    %v167 = vadd.f32 0.0, %v166
    %v168 = vpop.f32.mrb[0].mxu0
    %169 = vmatprep.mubr.f32.mxu0 0.0
    %170 = vmatmul.mubr.f32.gmra.mrb[0].mxu0 %v48
    %v171 = vpop.f32.mrb[0].mxu0
    %v172 = vadd.f32 0.0, %v171
    %v173 = vpop.f32.mrb[0].mxu0
    %174 = vmatprep.mubr.f32.mxu0 0.0
    %175 = vmatmul.mubr.f32.gmra.mrb[0].mxu0 %v51
    %v176 = vpop.f32.mrb[0].mxu0
    %v177 = vadd.f32 0.0, %v176
    %v178 = vpop.f32.mrb[0].mxu0
    %179 = vmatprep.mubr.f32.mxu0 0.0
    %180 = vmatmul.mubr.f32.gmra.mrb[0].mxu0 %v54
    %v181 = vpop.f32.mrb[0].mxu0
    %v182 = vadd.f32 0.0, %v181
    %v183 = vpop.f32.mrb[0].mxu0
    %184 = vmatprep.mubr.f32.mxu0 0.0
    %185 = vmatmul.mubr.f32.gmra.mrb[0].mxu0 %v57
    %v186 = vpop.f32.mrb[0].mxu0
    %v187 = vadd.f32 0.0, %v186
    %v188 = vpop.f32.mrb[0].mxu0
    %189 = vmatprep.mubr.f32.mxu0 0.0
    %190 = vmatmul.mubr.f32.gmra.mrb[0].mxu0 %v60
    %v191 = vpop.f32.mrb[0].mxu0
    %v192 = vadd.f32 0.0, %v191
    %v193 = vpop.f32.mrb[0].mxu0
    %194 = vmatprep.mubr.f32.mxu0 0.0
    %195 = vmatmul.mubr.f32.gmra.mrb[0].mxu0 %v63
    %v196 = vpop.f32.mrb[0].mxu0
    %v197 = vadd.f32 0.0, %v196
    %v198 = vpop.f32.mrb[0].mxu0
    %199 = vmatprep.mubr.f32.mxu0 0.0
    %200 = vmatmul.mubr.f32.gmra.mrb[0].mxu0 %v66
    %v201 = vpop.f32.mrb[0].mxu0
    %v202 = vadd.f32 0.0, %v201
    %v203 = vpop.f32.mrb[0].mxu0
    %204 = vmatprep.mubr.f32.mxu0 0.0
    %205 = vmatmul.mubr.f32.gmra.mrb[0].mxu0 %v69
    %v206 = vpop.f32.mrb[0].mxu0
    %v207 = vadd.f32 0.0, %v206
    %v208 = vpop.f32.mrb[0].mxu0
    %209 = vmatprep.mubr.f32.mxu0 0.0
    %210 = vmatmul.mubr.f32.gmra.mrb[0].mxu0 %v72
    %v211 = vpop.f32.mrb[0].mxu0
    %v212 = vadd.f32 0.0, %v211
    %v213 = vpop.f32.mrb[0].mxu0
    %214 = vmatprep.mubr.f32.mxu0 0.0
    %215 = vmatmul.mubr.f32.gmra.mrb[0].mxu0 %v75
    %v216 = vpop.f32.mrb[0].mxu0
    %v217 = vadd.f32 0.0, %v216
    %v218 = vpop.f32.mrb[0].mxu0
    %219 = vmatprep.mubr.f32.mxu0 0.0
    %220 = vmatmul.mubr.f32.gmra.mrb[0].mxu0 %v78
    %v221 = vpop.f32.mrb[0].mxu0
    %v222 = vadd.f32 0.0, %v221
    %v223 = vpop.f32.mrb[0].mxu0
    %224 = vmatprep.mubr.f32.mxu0 0.0
    %225 = vmatmul.mubr.f32.gmra.mrb[0].mxu0 %v81
    %v226 = vpop.f32.mrb[0].mxu0
    %v227 = vadd.f32 0.0, %v226
    %v228 = vpop.f32.mrb[0].mxu0
    %229 = vmatprep.mubr.f32.mxu0 0.0
    %230 = vmatmul.mubr.f32.gmra.mrb[0].mxu0 %v84
    %v231 = vpop.f32.mrb[0].mxu0
    %v232 = vadd.f32 0.0, %v231
    %v233 = vpop.f32.mrb[0].mxu0
    %234 = vdwg.mxu0
    %v235 = vld [vmem:[%s2] sm:$0xff]
    %v236 = vld [vmem:[%s2 + $0x8] sm:$0xff]
    %v237 = vld [vmem:[%s2 + $0x10] sm:$0xff]
    %v238 = vld [vmem:[%s2 + $0x18] sm:$0xff]
    %v239 = vld [vmem:[%s2 + $0x20] sm:$0xff]
    %v240 = vld [vmem:[%s2 + $0x28] sm:$0xff]
    %v241 = vld [vmem:[%s2 + $0x30] sm:$0xff]
    %v242 = vld [vmem:[%s2 + $0x38] sm:$0xff]
    %v243 = vld [vmem:[%s2 + $0x40] sm:$0xff]
    %v244 = vld [vmem:[%s2 + $0x48] sm:$0xff]
    %v245 = vld [vmem:[%s2 + $0x50] sm:$0xff]
    %v246 = vld [vmem:[%s2 + $0x58] sm:$0xff]
    %v247 = vld [vmem:[%s2 + $0x60] sm:$0xff]
    %v248 = vld [vmem:[%s2 + $0x68] sm:$0xff]
    %v249 = vld [vmem:[%s2 + $0x70] sm:$0xff]
    %v250 = vld [vmem:[%s2 + $0x78] sm:$0xff]
    %251 = vmatprep.subr.mxu0 0.0
    %252 = vmatpush1.msra.mxu0 %v235
    %253 = vmatprep.subr.mxu0 0.0
    %254 = vmatpush1.msra.mxu0 %v236
    %255 = vmatprep.subr.mxu0 0.0
    %256 = vmatpush1.msra.mxu0 %v237
    %257 = vmatprep.subr.mxu0 0.0
    %258 = vmatpush1.msra.mxu0 %v238
    %259 = vmatprep.subr.mxu0 0.0
    %260 = vmatpush1.msra.mxu0 %v239
    %261 = vmatprep.subr.mxu0 0.0
    %262 = vmatpush1.msra.mxu0 %v240
    %263 = vmatprep.subr.mxu0 0.0
    %264 = vmatpush1.msra.mxu0 %v241
    %265 = vmatprep.subr.mxu0 0.0
    %266 = vmatpush1.msra.mxu0 %v242
    %267 = vmatprep.subr.mxu0 0.0
    %268 = vmatpush1.msra.mxu0 %v243
    %269 = vmatprep.subr.mxu0 0.0
    %270 = vmatpush1.msra.mxu0 %v244
    %271 = vmatprep.subr.mxu0 0.0
    %272 = vmatpush1.msra.mxu0 %v245
    %273 = vmatprep.subr.mxu0 0.0
    %274 = vmatpush1.msra.mxu0 %v246
    %275 = vmatprep.subr.mxu0 0.0
    %276 = vmatpush1.msra.mxu0 %v247
    %277 = vmatprep.subr.mxu0 0.0
    %278 = vmatpush1.msra.mxu0 %v248
    %279 = vmatprep.subr.mxu0 0.0
    %280 = vmatpush1.msra.mxu0 %v249
    %281 = vmatprep.subr.mxu0 0.0
    %282 = vmatpush1.msra.mxu0 %v250
    %283 = vmatprep.subr.mxu0 0.0
    %284 = vmatpush1.msra.mxu0 0.0
    %285 = vmatprep.subr.mxu0 0.0
    %286 = vmatpush1.msra.mxu0 0.0
    %287 = vmatprep.subr.mxu0 0.0
    %288 = vmatpush1.msra.mxu0 0.0
    %289 = vmatprep.subr.mxu0 0.0
    %290 = vmatpush1.msra.mxu0 0.0
    %291 = vmatprep.subr.mxu0 0.0
    %292 = vmatpush1.msra.mxu0 0.0
    %293 = vmatprep.subr.mxu0 0.0
    %294 = vmatpush1.msra.mxu0 0.0
    %295 = vmatprep.subr.mxu0 0.0
    %296 = vmatpush1.msra.mxu0 0.0
    %297 = vmatprep.subr.mxu0 0.0
    %298 = vmatpush1.msra.mxu0 0.0
    %299 = vmatprep.subr.mxu0 0.0
    %300 = vmatpush1.msra.mxu0 0.0
    %301 = vmatprep.subr.mxu0 0.0
    %302 = vmatpush1.msra.mxu0 0.0
    %303 = vmatprep.subr.mxu0 0.0
    %304 = vmatpush1.msra.mxu0 0.0
    %305 = vmatprep.subr.mxu0 0.0
    %306 = vmatpush1.msra.mxu0 0.0
    %307 = vmatprep.subr.mxu0 0.0
    %308 = vmatpush1.msra.mxu0 0.0
    %309 = vmatprep.subr.mxu0 0.0
    %310 = vmatpush1.msra.mxu0 0.0
    %311 = vmatprep.subr.mxu0 0.0
    %312 = vmatpush1.msra.mxu0 0.0
    %313 = vmatprep.subr.mxu0 0.0
    %314 = vmatpush1.msra.mxu0 0.0
    %315 = vmatprep.mubr.f32.mxu0 0.0
    %316 = vmatmul.mubr.f32.gmra.mrb[0].mxu0 %v157
    %v317 = vpop.f32.mrb[0].mxu0
    %v318 = vadd.f32 0.0, %v317
    %v319 = vpop.f32.mrb[0].mxu0
    %320 = vmatprep.mubr.f32.mxu0 0.0
    %321 = vmatmul.mubr.f32.gmra.mrb[0].mxu0 %v162
    %v322 = vpop.f32.mrb[0].mxu0
    %v323 = vadd.f32 0.0, %v322
    %v324 = vpop.f32.mrb[0].mxu0
    %325 = vmatprep.mubr.f32.mxu0 0.0
    %326 = vmatmul.mubr.f32.gmra.mrb[0].mxu0 %v167
    %v327 = vpop.f32.mrb[0].mxu0
    %v328 = vadd.f32 0.0, %v327
    %v329 = vpop.f32.mrb[0].mxu0
    %330 = vmatprep.mubr.f32.mxu0 0.0
    %331 = vmatmul.mubr.f32.gmra.mrb[0].mxu0 %v172
    %v332 = vpop.f32.mrb[0].mxu0
    %v333 = vadd.f32 0.0, %v332
    %v334 = vpop.f32.mrb[0].mxu0
    %335 = vmatprep.mubr.f32.mxu0 0.0
    %336 = vmatmul.mubr.f32.gmra.mrb[0].mxu0 %v177
    %v337 = vpop.f32.mrb[0].mxu0
    %v338 = vadd.f32 0.0, %v337
    %v339 = vpop.f32.mrb[0].mxu0
    %340 = vmatprep.mubr.f32.mxu0 0.0
    %341 = vmatmul.mubr.f32.gmra.mrb[0].mxu0 %v182
    %v342 = vpop.f32.mrb[0].mxu0
    %v343 = vadd.f32 0.0, %v342
    %v344 = vpop.f32.mrb[0].mxu0
    %345 = vmatprep.mubr.f32.mxu0 0.0
    %346 = vmatmul.mubr.f32.gmra.mrb[0].mxu0 %v187
    %v347 = vpop.f32.mrb[0].mxu0
    %v348 = vadd.f32 0.0, %v347
    %v349 = vpop.f32.mrb[0].mxu0
    %350 = vmatprep.mubr.f32.mxu0 0.0
    %351 = vmatmul.mubr.f32.gmra.mrb[0].mxu0 %v192
    %v352 = vpop.f32.mrb[0].mxu0
    %v353 = vadd.f32 0.0, %v352
    %v354 = vpop.f32.mrb[0].mxu0
    %355 = vmatprep.mubr.f32.mxu0 0.0
    %356 = vmatmul.mubr.f32.gmra.mrb[0].mxu0 %v197
    %v357 = vpop.f32.mrb[0].mxu0
    %v358 = vadd.f32 0.0, %v357
    %v359 = vpop.f32.mrb[0].mxu0
    %360 = vmatprep.mubr.f32.mxu0 0.0
    %361 = vmatmul.mubr.f32.gmra.mrb[0].mxu0 %v202
    %v362 = vpop.f32.mrb[0].mxu0
    %v363 = vadd.f32 0.0, %v362
    %v364 = vpop.f32.mrb[0].mxu0
    %365 = vmatprep.mubr.f32.mxu0 0.0
    %366 = vmatmul.mubr.f32.gmra.mrb[0].mxu0 %v207
    %v367 = vpop.f32.mrb[0].mxu0
    %v368 = vadd.f32 0.0, %v367
    %v369 = vpop.f32.mrb[0].mxu0
    %370 = vmatprep.mubr.f32.mxu0 0.0
    %371 = vmatmul.mubr.f32.gmra.mrb[0].mxu0 %v212
    %v372 = vpop.f32.mrb[0].mxu0
    %v373 = vadd.f32 0.0, %v372
    %v374 = vpop.f32.mrb[0].mxu0
    %375 = vmatprep.mubr.f32.mxu0 0.0
    %376 = vmatmul.mubr.f32.gmra.mrb[0].mxu0 %v217
    %v377 = vpop.f32.mrb[0].mxu0
    %v378 = vadd.f32 0.0, %v377
    %v379 = vpop.f32.mrb[0].mxu0
    %380 = vmatprep.mubr.f32.mxu0 0.0
    %381 = vmatmul.mubr.f32.gmra.mrb[0].mxu0 %v222
    %v382 = vpop.f32.mrb[0].mxu0
    %v383 = vadd.f32 0.0, %v382
    %v384 = vpop.f32.mrb[0].mxu0
    %385 = vmatprep.mubr.f32.mxu0 0.0
    %386 = vmatmul.mubr.f32.gmra.mrb[0].mxu0 %v227
    %v387 = vpop.f32.mrb[0].mxu0
    %v388 = vadd.f32 0.0, %v387
    %v389 = vpop.f32.mrb[0].mxu0
    %390 = vmatprep.mubr.f32.mxu0 0.0
    %391 = vmatmul.mubr.f32.gmra.mrb[0].mxu0 %v232
    %v392 = vpop.f32.mrb[0].mxu0
    %v393 = vadd.f32 0.0, %v392
    %v394 = vpop.f32.mrb[0].mxu0
    %395 = vdwg.mxu0
    %396 = vst [vmem:[#allocation4] sm:$0xff] %v318
    %397 = vst [vmem:[#allocation4 + $0x8] sm:$0xff] %v323
    %398 = vst [vmem:[#allocation4 + $0x10] sm:$0xff] %v328
    %399 = vst [vmem:[#allocation4 + $0x18] sm:$0xff] %v333
    %400 = vst [vmem:[#allocation4 + $0x20] sm:$0xff] %v338
    %401 = vst [vmem:[#allocation4 + $0x28] sm:$0xff] %v343
    %402 = vst [vmem:[#allocation4 + $0x30] sm:$0xff] %v348
    %403 = vst [vmem:[#allocation4 + $0x38] sm:$0xff] %v353
    %404 = vst [vmem:[#allocation4 + $0x40] sm:$0xff] %v358
    %405 = vst [vmem:[#allocation4 + $0x48] sm:$0xff] %v363
    %406 = vst [vmem:[#allocation4 + $0x50] sm:$0xff] %v368
    %407 = vst [vmem:[#allocation4 + $0x58] sm:$0xff] %v373
    %408 = vst [vmem:[#allocation4 + $0x60] sm:$0xff] %v378
    %409 = vst [vmem:[#allocation4 + $0x68] sm:$0xff] %v383
    %410 = vst [vmem:[#allocation4 + $0x70] sm:$0xff] %v388
    %411 = vst [vmem:[#allocation4 + $0x78] sm:$0xff] %v393
    %v412 = vpack.c.bf16 %v162, %v157
    %v413 = vpack.c.bf16 %v172, %v167
    %v414 = vpack.c.bf16 %v182, %v177
    %v415 = vpack.c.bf16 %v192, %v187
    %v416 = vpack.c.bf16 %v202, %v197
    %v417 = vpack.c.bf16 %v212, %v207
    %v418 = vpack.c.bf16 %v222, %v217
    %v419 = vpack.c.bf16 %v232, %v227
    %v428 = vunpack.c.l.b16 %v412
    %v429 = vunpack.c.h.b16 %v412
    %v430 = vunpack.c.l.b16 %v413
    %v431 = vunpack.c.h.b16 %v413
    %v432 = vunpack.c.l.b16 %v414
    %v433 = vunpack.c.h.b16 %v414
    %v434 = vunpack.c.l.b16 %v415
    %v435 = vunpack.c.h.b16 %v415
    %v436 = vunpack.c.l.b16 %v416
    %v437 = vunpack.c.h.b16 %v416
    %v438 = vunpack.c.l.b16 %v417
    %v439 = vunpack.c.h.b16 %v417
    %v440 = vunpack.c.l.b16 %v418
    %v441 = vunpack.c.h.b16 %v418
    %v442 = vunpack.c.l.b16 %v419
    %v443 = vunpack.c.h.b16 %v419
    %v444 = vpack.c.b16 %v428, %v428
    %v445 = vpack.c.b16 %v429, %v429
    %v446 = vpack.c.b16 %v430, %v430
    %v447 = vpack.c.b16 %v431, %v431
    %v448 = vpack.c.b16 %v432, %v432
    %v449 = vpack.c.b16 %v433, %v433
    %v450 = vpack.c.b16 %v434, %v434
    %v451 = vpack.c.b16 %v435, %v435
    %v452 = vpack.c.b16 %v436, %v436
    %v453 = vpack.c.b16 %v437, %v437
    %v454 = vpack.c.b16 %v438, %v438
    %v455 = vpack.c.b16 %v439, %v439
    %v456 = vpack.c.b16 %v440, %v440
    %v457 = vpack.c.b16 %v441, %v441
    %v458 = vpack.c.b16 %v442, %v442
    %v459 = vpack.c.b16 %v443, %v443
    %476 = vst [vmem:[#allocation2] sm:$0xf] %v444
    %477 = vst [vmem:[#allocation2 + $0x4] sm:$0xf] %v445
    %478 = vst [vmem:[#allocation2 + $0x8] sm:$0xf] %v446
    %479 = vst [vmem:[#allocation2 + $0xc] sm:$0xf] %v447
    %480 = vst [vmem:[#allocation2 + $0x10] sm:$0xf] %v448
    %481 = vst [vmem:[#allocation2 + $0x14] sm:$0xf] %v449
    %482 = vst [vmem:[#allocation2 + $0x18] sm:$0xf] %v450
    %483 = vst [vmem:[#allocation2 + $0x1c] sm:$0xf] %v451
    %484 = vst [vmem:[#allocation2 + $0x20] sm:$0xf] %v452
    %485 = vst [vmem:[#allocation2 + $0x24] sm:$0xf] %v453
    %486 = vst [vmem:[#allocation2 + $0x28] sm:$0xf] %v454
    %487 = vst [vmem:[#allocation2 + $0x2c] sm:$0xf] %v455
    %488 = vst [vmem:[#allocation2 + $0x30] sm:$0xf] %v456
    %489 = vst [vmem:[#allocation2 + $0x34] sm:$0xf] %v457
    %490 = vst [vmem:[#allocation2 + $0x38] sm:$0xf] %v458
    %491 = vst [vmem:[#allocation2 + $0x3c] sm:$0xf] %v459
    // Predicated region
    $region14: #{tpu_custom_call.1} parent=1 // pred_check
      _
    $region15: #{tpu_custom_call.1} parent=1 // pred_check_branch
      %493 = sbr.rel (0) target = $region17
    $region16: #{tpu_custom_call.1} parent=1 // pred_region
      %s495 = ssub.s32 1024, 1024
      %496 = vsyncadd [#allocation3], %s495
      %s497 = sshll.u32 [#allocation2], 4
      %s498 = int_to_ptr.vmem [resolvable:$true] %s497
      %503 = dma.vmem_to_hbm [thread:$0]  %s498, 1024, %s3, [#allocation3], 64, 64, 4
    $region17: #{tpu_custom_call.1} parent=1 // pred_fallthru
      _
    // Predicated region
    $region18: #{tpu_custom_call.1} parent=1 // pred_check
      _
    $region19: #{tpu_custom_call.1} parent=1 // pred_check_branch
      %505 = sbr.rel (0) target = $region21
    $region20: #{tpu_custom_call.1} parent=1 // pred_region
      %s507 = ssub.s32 2048, 2048
      %508 = vsyncadd [#allocation5], %s507
      %s509 = sshll.u32 [#allocation4], 4
      %s510 = int_to_ptr.vmem [resolvable:$true] %s509
      %515 = dma.vmem_to_hbm [thread:$0]  %s510, 2048, %s4, [#allocation5], 128, 128, 8
    $region21: #{tpu_custom_call.1} parent=1 // pred_fallthru
      _
    // Predicated region
    $region22: #{tpu_custom_call.1} parent=1 // pred_check
      _
    $region23: #{tpu_custom_call.1} parent=1 // pred_check_branch
      %517 = sbr.rel (0) target = $region25
    $region24: #{tpu_custom_call.1} parent=1 // pred_region
      %518 = dma.done [#allocation3], 1024
    $region25: #{tpu_custom_call.1} parent=1 // pred_fallthru
      _
    // Predicated region
    $region26: #{tpu_custom_call.1} parent=1 // pred_check
      _
    $region27: #{tpu_custom_call.1} parent=1 // pred_check_branch
      %520 = sbr.rel (0) target = $region29
    $region28: #{tpu_custom_call.1} parent=1 // pred_region
      %521 = dma.done [#allocation5], 2048
    $region29: #{tpu_custom_call.1} parent=1 // pred_fallthru
      _
    %522 = vsyncpa [#allocation3], 1
    %523 = vsyncpa [#allocation5], 1

</llo_original>
